<compile_context>
chip_gen: v7x
topology: tpu7x:2x2x1
jax: 0.10.0
libtpu: 0.0.40
codegen_flags: <defaults>
</compile_context>

<pallas_src>
import jax
import jax.numpy as jnp
import numpy as np
from jax.experimental import pallas as pl
from jax.experimental.pallas import tpu as pltpu

GA_DIM = 16               # Cl(1,3) multivector components (reference/docs only)
PARTICLES_PER_ROW = 32    # 32 particles x 4 features = 128 lanes
TILE_ROWS_MAX = 2048      # 2048 rows x 128 lanes x 4 B = 1 MiB input block / step


def _round_up(n, m):
    return ((n + m - 1) // m) * m


def _tensorcores_per_chip():
    """Best-effort TPU-generation probe (v7x has 2 TensorCores per chip)."""
    try:
        kind = jax.devices()[0].device_kind.lower()
    except Exception:
        return 1
    if ("v7" in kind) or ("tpu7" in kind) or ("7x" in kind):
        return 2
    return 1


def _pick_tile_rows(rows, n_tc):
    """Rows (of 32 particles each) per grid step.

    v5e/v6e (1 TC): one maximal tile is fastest (per-step overhead ~0.35us).
    v7x (2 TC):     keep >= 2 grid steps per TensorCore so each core still
                    overlaps DMA with compute after megacore sharding.
    """
    if rows <= 8:
        return rows
    if n_tc >= 2:
        tr = (rows // (2 * n_tc)) // 8 * 8
        return max(8, min(TILE_ROWS_MAX, tr))
    if rows <= TILE_ROWS_MAX:
        return rows
    return TILE_ROWS_MAX


def _particle_mass_kernel(x_ref, m_ref, p_ref, o_ref):
    # x_ref: (TR, 128)  natural interleaved layout: 32 particles/row,
    #                   4 consecutive features per particle
    # m_ref: (128, 32)  constant +-1/0 metric-selection matrix:
    #                   (x*x) @ m  ->  per-particle (x0^2 - x1^2 - x2^2 - x3^2)
    # p_ref: (8,) SMEM  folded scalars:
    #                   [0] g_w = w_gate*w1^2      [1] g_b = w_gate*b0^2+b_gate
    #                   [2] A   = (w_a+w_c*w_mv2s)*b0
    #                   [3] B   = (w_b+w_c*w_inner)*w1^2
    #                   [4] C   = (w_b+w_c*w_inner)*b0^2 + w_c*b_s + b_out
    # o_ref: (TR, 32)   extracted e_0 scalar per particle (lane-dense)

    x = x_ref[...]                                   # (TR, 128)
    y = x * x                                        # squared features (VPU)

    # Manual hi/lo split: the selection matrix is exactly +-1/0, and y_hi is
    # exactly bf16-representable, so the two MXU passes reproduce the f32
    # quadratic form to ~2^-16 regardless of default matmul precision.
    y_hi = y.astype(jnp.bfloat16).astype(jnp.float32)
    y_lo = y - y_hi
    m = m_ref[...]
    q = (jnp.dot(y_hi, m, preferred_element_type=jnp.float32)
         + jnp.dot(y_lo, m, preferred_element_type=jnp.float32))   # (TR, 32)

    # scalar-gated nonlinearity (sigmoid), divide-free: exp + approx recip (EUP)
    z = p_ref[0] * q + p_ref[1]
    gate = pl.reciprocal(1.0 + jnp.exp(-z), approx=True)

    # folded output EquiLinear -> extracted e_0 scalar
    o_ref[...] = p_ref[2] * gate + p_ref[3] * q + p_ref[4]


def make_params():
    """Deterministic synthetic-net parameters (same values as before)."""
    key = jax.random.PRNGKey(0)
    k1, k2, _ = jax.random.split(key, 3)

    # per-grade weights (grades: 0 | 1-4 | 5-10 | 11-14 | 15)
    grade_w = jax.random.normal(k1, (5,), jnp.float32)

    # invariant bias / scalar->mv coupling live only on e_0
    bias_e0 = jnp.float32(0.3)
    s2mv_e0 = jnp.float32(0.7)   # dead (scalars == 0), kept for documentation

    # scalar params: [w_gate, b_gate, w_s2s, w_mv2s, w_inner, b_s,
    #                 w_a, w_b, w_c, b_out]
    pv = jax.random.normal(k2, (10,), jnp.float32) * 0.5

    return dict(grade_w=grade_w, bias_e0=bias_e0, s2mv_e0=s2mv_e0, pv=pv)


def _fold_params(params):
    """Host-side constant folding -> (metric-selection matrix, 5 SMEM scalars)."""
    w1 = params["grade_w"][1]
    b0 = params["bias_e0"]
    pv = params["pv"]
    w_gate, b_gate = pv[0], pv[1]
    # pv[2] (w_s2s) multiplies the identically-zero scalar channel -> dropped.
    w_mv2s, w_inner, b_s = pv[3], pv[4], pv[5]
    w_a, w_b, w_c, b_out = pv[6], pv[7], pv[8], pv[9]

    # selection matrix: column j sums lanes 4j..4j+3 with Lorentz metric signs
    metric = np.array([1.0, -1.0, -1.0, -1.0], np.float32)
    m_np = np.zeros((128, PARTICLES_PER_ROW), np.float32)
    for lane in range(128):
        m_np[lane, lane // 4] = metric[lane % 4]
    m_sel = jnp.asarray(m_np)

    w1sq = w1 * w1
    a_coef = (w_a + w_c * w_mv2s) * b0
    b_coef = w_b + w_c * w_inner
    c_coef = b_coef * b0 * b0 + w_c * b_s + b_out

    p = jnp.stack([
        w_gate * w1sq,                 # 0: gate scale on raw quadratic form
        w_gate * b0 * b0 + b_gate,     # 1: gate bias (b0^2 folded)
        a_coef,                        # 2: gate coefficient
        b_coef * w1sq,                 # 3: quadratic-form coefficient
        c_coef,                        # 4: constant term
        jnp.float32(0.0), jnp.float32(0.0), jnp.float32(0.0),
    ]).astype(jnp.float32)
    return m_sel, p


def particle_mass_forward(inputs, params, *, tile_rows=None):
    """inputs: (B, 1, 4) float32  ->  outputs: (B, 1, 1) float32."""
    B, num_objects, num_features = inputs.shape
    assert num_objects == 1 and num_features == 4

    m_sel, p_smem = _fold_params(params)

    # natural contiguous layout, metadata-only relayout to (rows, 128)
    x = inputs.reshape(B, 4).astype(jnp.float32)
    Bp = _round_up(B, PARTICLES_PER_ROW)
    if Bp != B:
        # TODO(synk): pad copy only happens when B % 32 != 0; a fully copy-free
        # path for ragged batches would need a BoundedSlice-style tail handler.
        x = jnp.pad(x, ((0, Bp - B), (0, 0)))
    rows = Bp // PARTICLES_PER_ROW
    xr = x.reshape(rows, 128)                       # metadata-only

    if tile_rows is not None:
        tr = min(tile_rows, rows)
    else:
        tr = _pick_tile_rows(rows, _tensorcores_per_chip())
    grid = (pl.cdiv(rows, tr),)

    out = pl.pallas_call(
        _particle_mass_kernel,
        out_shape=jax.ShapeDtypeStruct((rows, PARTICLES_PER_ROW), jnp.float32),
        grid=grid,
        in_specs=[
            pl.BlockSpec((tr, 128), lambda i: (i, 0)),               # particles
            pl.BlockSpec((128, PARTICLES_PER_ROW), lambda i: (0, 0)),  # const matrix
            pl.BlockSpec(memory_space=pltpu.MemorySpace.SMEM),       # folded scalars
        ],
        out_specs=pl.BlockSpec((tr, PARTICLES_PER_ROW), lambda i: (i, 0)),
        compiler_params=pltpu.CompilerParams(
            dimension_semantics=("parallel",),
            vmem_limit_bytes=32 * 1024 * 1024,
        ),
        cost_estimate=pl.CostEstimate(
            flops=int(530 * Bp),
            transcendentals=int(2 * Bp),
            bytes_accessed=int(20 * Bp) + 128 * PARTICLES_PER_ROW * 4 + 32,
        ),
    )(xr, m_sel, p_smem)

    return out.reshape(Bp)[:B].reshape(B, 1, 1)


def _reference_forward(inputs, params):
    """Pure-JAX reference of the same synthetic GA block (for sanity check)."""
    x = inputs[:, 0, :].astype(jnp.float32)                  # (B, 4)
    w1 = params["grade_w"][1]
    b0 = params["bias_e0"]
    pv = params["pv"]
    v = x * w1
    s1 = (b0 * b0 + v[:, 0:1] ** 2 - v[:, 1:2] ** 2
          - v[:, 2:3] ** 2 - v[:, 3:4] ** 2)                  # (B, 1)
    gate = jax.nn.sigmoid(pv[0] * s1 + pv[1])
    mv2_0 = b0 * gate
    s_out = pv[3] * mv2_0 + pv[4] * s1 + pv[5]
    out = pv[6] * mv2_0 + pv[7] * s1 + pv[8] * s_out + pv[9]
    return out.reshape(-1, 1, 1)


if __name__ == "__main__":
    params = make_params()

    # primary small test: B multiple of 32 -> fully metadata-only relayout
    B = 96
    key = jax.random.PRNGKey(0)
    inputs = jax.random.normal(key, (B, 1, 4), dtype=jnp.float32)

    out = particle_mass_forward(inputs, params)
    out = jax.block_until_ready(out)
    assert out.shape == (B, 1, 1), out.shape
    assert out.dtype == jnp.float32

    ref = _reference_forward(inputs, params)
    np.testing.assert_allclose(np.asarray(out), np.asarray(ref),
                               rtol=2e-3, atol=2e-3)

    # secondary test: ragged batch (pad to 32) + multi-block grid with a
    # partial last block (forced small row tile)
    B2 = 300
    inputs2 = jax.random.normal(jax.random.PRNGKey(1), (B2, 1, 4),
                                dtype=jnp.float32)
    out2 = jax.block_until_ready(
        particle_mass_forward(inputs2, params, tile_rows=8))
    ref2 = _reference_forward(inputs2, params)
    np.testing.assert_allclose(np.asarray(out2), np.asarray(ref2),
                               rtol=2e-3, atol=2e-3)

    print("KERNEL_OK")
</pallas_src>

<mosaic_0001>
module attributes {stable_mosaic.version = 11 : i64} {
  func.func @_particle_mass_kernel(%arg0: i32, %arg1: memref<3x128xf32, #tpu.memory_space<vmem>>, %arg2: memref<128x32xf32, #tpu.memory_space<vmem>>, %arg3: memref<8xf32, #tpu.memory_space<smem>>, %arg4: memref<3x32xf32, #tpu.memory_space<vmem>>) attributes {dimension_semantics = [#tpu.dimension_semantics<parallel>], iteration_bounds = array<i64: 1>, scalar_prefetch = 0 : i64, scratch_operands = 0 : i64, tpu.core_type = #tpu.core_type<tc>, window_params = [{transform_indices = @transform_0, window_bounds = array<i64: 3, 128>}, {pipeline_mode = #tpu.pipeline_mode<synchronous>, transform_indices = @transform_1, window_bounds = array<i64: 128, 32>}, {transform_indices = @transform_2, window_bounds = array<i64: 8>}, {transform_indices = @transform_3, window_bounds = array<i64: 3, 32>}]} {
    %c0 = arith.constant 0 : index
    %c0_0 = arith.constant 0 : index
    %0 = vector.load %arg1[%c0, %c0_0] : memref<3x128xf32, #tpu.memory_space<vmem>>, vector<3x128xf32>
    %1 = arith.mulf %0, %0 : vector<3x128xf32>
    %2 = arith.truncf %1 : vector<3x128xf32> to vector<3x128xbf16>
    %3 = arith.extf %2 : vector<3x128xbf16> to vector<3x128xf32>
    %4 = arith.subf %1, %3 : vector<3x128xf32>
    %c0_1 = arith.constant 0 : index
    %c0_2 = arith.constant 0 : index
    %5 = vector.load %arg2[%c0_1, %c0_2] : memref<128x32xf32, #tpu.memory_space<vmem>>, vector<128x32xf32>
    %cst = arith.constant dense<0.000000e+00> : vector<3x32xf32>
    %6 = tpu.matmul %3, %5, %cst {dimension_numbers = #tpu.dot_dimension_numbers<[1], [0], [0], [1], [0, 0, 1, 1], [], []>} : vector<3x128xf32>, vector<128x32xf32>, vector<3x32xf32> -> vector<3x32xf32>
    %cst_3 = arith.constant dense<0.000000e+00> : vector<3x32xf32>
    %7 = tpu.matmul %4, %5, %cst_3 {dimension_numbers = #tpu.dot_dimension_numbers<[1], [0], [0], [1], [0, 0, 1, 1], [], []>} : vector<3x128xf32>, vector<128x32xf32>, vector<3x32xf32> -> vector<3x32xf32>
    %8 = arith.addf %6, %7 : vector<3x32xf32>
    %c0_4 = arith.constant 0 : index
    %9 = memref.load %arg3[%c0_4] : memref<8xf32, #tpu.memory_space<smem>>
    %10 = vector.broadcast %9 : f32 to vector<3x32xf32>
    %11 = arith.mulf %10, %8 : vector<3x32xf32>
    %c1 = arith.constant 1 : index
    %12 = memref.load %arg3[%c1] : memref<8xf32, #tpu.memory_space<smem>>
    %13 = vector.broadcast %12 : f32 to vector<3x32xf32>
    %14 = arith.addf %11, %13 : vector<3x32xf32>
    %cst_5 = arith.constant 0.000000e+00 : f32
    %15 = vector.broadcast %cst_5 : f32 to vector<3x32xf32>
    %16 = arith.subf %15, %14 : vector<3x32xf32>
    %17 = math.exp %16 : vector<3x32xf32>
    %cst_6 = arith.constant 1.000000e+00 : f32
    %18 = vector.broadcast %cst_6 : f32 to vector<3x32xf32>
    %19 = arith.addf %18, %17 : vector<3x32xf32>
    %20 = tpu.reciprocal %19 {approx = true} : vector<3x32xf32> -> vector<3x32xf32>
    %c2 = arith.constant 2 : index
    %21 = memref.load %arg3[%c2] : memref<8xf32, #tpu.memory_space<smem>>
    %22 = vector.broadcast %21 : f32 to vector<3x32xf32>
    %23 = arith.mulf %22, %20 : vector<3x32xf32>
    %c3 = arith.constant 3 : index
    %24 = memref.load %arg3[%c3] : memref<8xf32, #tpu.memory_space<smem>>
    %25 = vector.broadcast %24 : f32 to vector<3x32xf32>
    %26 = arith.mulf %25, %8 : vector<3x32xf32>
    %27 = arith.addf %23, %26 : vector<3x32xf32>
    %c4 = arith.constant 4 : index
    %28 = memref.load %arg3[%c4] : memref<8xf32, #tpu.memory_space<smem>>
    %29 = vector.broadcast %28 : f32 to vector<3x32xf32>
    %30 = arith.addf %27, %29 : vector<3x32xf32>
    %c0_7 = arith.constant 0 : index
    %c0_8 = arith.constant 0 : index
    %31 = vector.load %arg4[%c0_7, %c0_8] : memref<3x32xf32, #tpu.memory_space<vmem>>, vector<3x32xf32>
    tpu.vector_store %arg4[%c0_7, %c0_8], %30 {strides = array<i32>} : memref<3x32xf32, #tpu.memory_space<vmem>>, vector<3x32xf32>,
    return
  }
  func.func @transform_0(%arg0: i32) -> (i32, i32) {
    %c0_i32 = arith.constant 0 : i32
    %c0_i32_0 = arith.constant 0 : i32
    return %arg0, %c0_i32 : i32, i32
  }
  func.func @transform_1(%arg0: i32) -> (i32, i32) {
    %c0_i32 = arith.constant 0 : i32
    %c0_i32_0 = arith.constant 0 : i32
    %c0_i32_1 = arith.constant 0 : i32
    return %c0_i32, %c0_i32_0 : i32, i32
  }
  func.func @transform_2(%arg0: i32) -> i32 {
    %c0_i32 = arith.constant 0 : i32
    %c0_i32_0 = arith.constant 0 : i32
    return %c0_i32 : i32
  }
  func.func @transform_3(%arg0: i32) -> (i32, i32) {
    %c0_i32 = arith.constant 0 : i32
    %c0_i32_0 = arith.constant 0 : i32
    return %arg0, %c0_i32 : i32, i32
  }
}

</mosaic_0001>

<llo_original>
// kernel: tpu_custom_call.1
$region0: #{tpu_custom_call.1}
  #allocation0 [shape = 'u32[]', space=smem, size = 0x4, offset = 0x4, fixed_abs, tag = 'smem constant byte address 0x4 - core index']
  #allocation1 [shape = 'u32[144,128]{1,0:T(1,128)}', space=vmem, size = 0x12000, scoped, tag = 'internal scratch']
  %s0 = inlined_call_operand.vmem [shape: f32[3,128], index: 0, kind: input, shape index: {}]
  %s1 = inlined_call_operand.vmem [shape: f32[128,32], index: 1, kind: input, shape index: {}]
  %s2 = inlined_call_operand.vmem [shape: f32[8], index: 2, kind: input, shape index: {}]
  %s3 = inlined_call_operand.hbm [shape: f32[3,32], index: 3, kind: output, shape index: {}]
  %s4 = sld [smem:[#allocation0]]
  $region26: #{tpu_custom_call.1} parent=0
    _
  %s6 = ssub.s32 1, %s4
  %s7 = scalar_select 0, %s6, %s4
  $region1: #{tpu_custom_call.1} parent=0
    #allocation2 [shape = 'u8[512]{0}', space=smem, size = 0x200, scoped, tag = 'input window, operand 2, single buffered']
    #allocation3 [shape = 's32[1]{0}', space=sflag, size = 0x4, scoped, tag = 'scoped memory for tpu_custom_call.1']
    #allocation4 [shape = 's32[1]{0}', space=sflag, size = 0x4, scoped, tag = 'scoped memory for tpu_custom_call.1']
    #allocation5 [shape = 'u8[2048]{0}', space=vmem, size = 0x800, scoped, tag = 'output window, operand 0, single buffered']
    %8 = vsyncpa [#allocation4], 0
    %9 = vsyncpa [#allocation3], 0
    // Predicated region
    $region2: #{tpu_custom_call.1} parent=1 // pred_check
      _
    $region3: #{tpu_custom_call.1} parent=1 // pred_check_branch
      %11 = sbr.rel (0) target = $region5
    $region4: #{tpu_custom_call.1} parent=1 // pred_region
      _
    $region5: #{tpu_custom_call.1} parent=1 // pred_fallthru
      _
    // Predicated region
    $region6: #{tpu_custom_call.1} parent=1 // pred_check
      _
    $region7: #{tpu_custom_call.1} parent=1 // pred_check_branch
      %13 = sbr.rel (0) target = $region9
    $region8: #{tpu_custom_call.1} parent=1 // pred_region
      _
    $region9: #{tpu_custom_call.1} parent=1 // pred_fallthru
      _
    // Predicated region
    $region10: #{tpu_custom_call.1} parent=1 // pred_check
      _
    $region11: #{tpu_custom_call.1} parent=1 // pred_check_branch
      %15 = sbr.rel (0) target = $region13
    $region12: #{tpu_custom_call.1} parent=1 // pred_region
      %s17 = ssub.s32 16, 16
      %18 = vsyncadd [#allocation4], %s17
      %s20 = sshll.u32 %s2, 4
      %s21 = int_to_ptr.vmem [resolvable:$true] %s20
      %23 = dma.vmem_to_smem %s21, 16, [#allocation2], [#allocation4]
    $region13: #{tpu_custom_call.1} parent=1 // pred_fallthru
      _
    // Predicated region
    $region14: #{tpu_custom_call.1} parent=1 // pred_check
      _
    $region15: #{tpu_custom_call.1} parent=1 // pred_check_branch
      %25 = sbr.rel (0) target = $region17
    $region16: #{tpu_custom_call.1} parent=1 // pred_region
      %26 = dma.done [#allocation4], 16
    $region17: #{tpu_custom_call.1} parent=1 // pred_fallthru
      _
    %27 = sfence
    %v28 = vld [vmem:[%s0] sm:$0x7]
    %v29 = vmul.f32 %v28, %v28
    %v30 = vpack.c.bf16 %v29, %v29
    %v31 = vunpack.c.l.bf16 %v30
    %v32 = vsub.f32 %v29, %v31
    %v33 = vld [vmem:[%s1] sm:$0xff]
    %v34 = vld [vmem:[%s1 + $0x8] sm:$0xff]
    %v35 = vld [vmem:[%s1 + $0x10] sm:$0xff]
    %v36 = vld [vmem:[%s1 + $0x18] sm:$0xff]
    %v37 = vld [vmem:[%s1 + $0x20] sm:$0xff]
    %v38 = vld [vmem:[%s1 + $0x28] sm:$0xff]
    %v39 = vld [vmem:[%s1 + $0x30] sm:$0xff]
    %v40 = vld [vmem:[%s1 + $0x38] sm:$0xff]
    %v41 = vld [vmem:[%s1 + $0x40] sm:$0xff]
    %v42 = vld [vmem:[%s1 + $0x48] sm:$0xff]
    %v43 = vld [vmem:[%s1 + $0x50] sm:$0xff]
    %v44 = vld [vmem:[%s1 + $0x58] sm:$0xff]
    %v45 = vld [vmem:[%s1 + $0x60] sm:$0xff]
    %v46 = vld [vmem:[%s1 + $0x68] sm:$0xff]
    %v47 = vld [vmem:[%s1 + $0x70] sm:$0xff]
    %v48 = vld [vmem:[%s1 + $0x78] sm:$0xff]
    %49 = vmatprep.subr.mxu0 0.0
    %50 = vmatpush1.msra.mxu0 %v33
    %51 = vmatprep.subr.mxu0 0.0
    %52 = vmatpush1.msra.mxu0 %v34
    %53 = vmatprep.subr.mxu0 0.0
    %54 = vmatpush1.msra.mxu0 %v35
    %55 = vmatprep.subr.mxu0 0.0
    %56 = vmatpush1.msra.mxu0 %v36
    %57 = vmatprep.subr.mxu0 0.0
    %58 = vmatpush1.msra.mxu0 %v37
    %59 = vmatprep.subr.mxu0 0.0
    %60 = vmatpush1.msra.mxu0 %v38
    %61 = vmatprep.subr.mxu0 0.0
    %62 = vmatpush1.msra.mxu0 %v39
    %63 = vmatprep.subr.mxu0 0.0
    %64 = vmatpush1.msra.mxu0 %v40
    %65 = vmatprep.subr.mxu0 0.0
    %66 = vmatpush1.msra.mxu0 %v41
    %67 = vmatprep.subr.mxu0 0.0
    %68 = vmatpush1.msra.mxu0 %v42
    %69 = vmatprep.subr.mxu0 0.0
    %70 = vmatpush1.msra.mxu0 %v43
    %71 = vmatprep.subr.mxu0 0.0
    %72 = vmatpush1.msra.mxu0 %v44
    %73 = vmatprep.subr.mxu0 0.0
    %74 = vmatpush1.msra.mxu0 %v45
    %75 = vmatprep.subr.mxu0 0.0
    %76 = vmatpush1.msra.mxu0 %v46
    %77 = vmatprep.subr.mxu0 0.0
    %78 = vmatpush1.msra.mxu0 %v47
    %79 = vmatprep.subr.mxu0 0.0
    %80 = vmatpush1.msra.mxu0 %v48
    %81 = vmatprep.subr.mxu0 0.0
    %82 = vmatpush1.msra.mxu0 0.0
    %83 = vmatprep.subr.mxu0 0.0
    %84 = vmatpush1.msra.mxu0 0.0
    %85 = vmatprep.subr.mxu0 0.0
    %86 = vmatpush1.msra.mxu0 0.0
    %87 = vmatprep.subr.mxu0 0.0
    %88 = vmatpush1.msra.mxu0 0.0
    %89 = vmatprep.subr.mxu0 0.0
    %90 = vmatpush1.msra.mxu0 0.0
    %91 = vmatprep.subr.mxu0 0.0
    %92 = vmatpush1.msra.mxu0 0.0
    %93 = vmatprep.subr.mxu0 0.0
    %94 = vmatpush1.msra.mxu0 0.0
    %95 = vmatprep.subr.mxu0 0.0
    %96 = vmatpush1.msra.mxu0 0.0
    %97 = vmatprep.subr.mxu0 0.0
    %98 = vmatpush1.msra.mxu0 0.0
    %99 = vmatprep.subr.mxu0 0.0
    %100 = vmatpush1.msra.mxu0 0.0
    %101 = vmatprep.subr.mxu0 0.0
    %102 = vmatpush1.msra.mxu0 0.0
    %103 = vmatprep.subr.mxu0 0.0
    %104 = vmatpush1.msra.mxu0 0.0
    %105 = vmatprep.subr.mxu0 0.0
    %106 = vmatpush1.msra.mxu0 0.0
    %107 = vmatprep.subr.mxu0 0.0
    %108 = vmatpush1.msra.mxu0 0.0
    %109 = vmatprep.subr.mxu0 0.0
    %110 = vmatpush1.msra.mxu0 0.0
    %111 = vmatprep.subr.mxu0 0.0
    %112 = vmatpush1.msra.mxu0 0.0
    %113 = vmatprep.mubr.f32.mxu0 0.0
    %114 = vmatmul.mubr.f32.gmra.mrb[0].mxu0 %v32
    %v115 = vpop.f32.mrb[0].mxu0
    %v116 = vadd.f32 0.0, %v115
    %v117 = vpop.f32.mrb[0].mxu0
    %118 = vdwg.mxu0
    %119 = vmatprep.subr.mxu0 0.0
    %120 = vmatpush1.msra.mxu0 %v33
    %121 = vmatprep.subr.mxu0 0.0
    %122 = vmatpush1.msra.mxu0 %v34
    %123 = vmatprep.subr.mxu0 0.0
    %124 = vmatpush1.msra.mxu0 %v35
    %125 = vmatprep.subr.mxu0 0.0
    %126 = vmatpush1.msra.mxu0 %v36
    %127 = vmatprep.subr.mxu0 0.0
    %128 = vmatpush1.msra.mxu0 %v37
    %129 = vmatprep.subr.mxu0 0.0
    %130 = vmatpush1.msra.mxu0 %v38
    %131 = vmatprep.subr.mxu0 0.0
    %132 = vmatpush1.msra.mxu0 %v39
    %133 = vmatprep.subr.mxu0 0.0
    %134 = vmatpush1.msra.mxu0 %v40
    %135 = vmatprep.subr.mxu0 0.0
    %136 = vmatpush1.msra.mxu0 %v41
    %137 = vmatprep.subr.mxu0 0.0
    %138 = vmatpush1.msra.mxu0 %v42
    %139 = vmatprep.subr.mxu0 0.0
    %140 = vmatpush1.msra.mxu0 %v43
    %141 = vmatprep.subr.mxu0 0.0
    %142 = vmatpush1.msra.mxu0 %v44
    %143 = vmatprep.subr.mxu0 0.0
    %144 = vmatpush1.msra.mxu0 %v45
    %145 = vmatprep.subr.mxu0 0.0
    %146 = vmatpush1.msra.mxu0 %v46
    %147 = vmatprep.subr.mxu0 0.0
    %148 = vmatpush1.msra.mxu0 %v47
    %149 = vmatprep.subr.mxu0 0.0
    %150 = vmatpush1.msra.mxu0 %v48
    %151 = vmatprep.subr.mxu0 0.0
    %152 = vmatpush1.msra.mxu0 0.0
    %153 = vmatprep.subr.mxu0 0.0
    %154 = vmatpush1.msra.mxu0 0.0
    %155 = vmatprep.subr.mxu0 0.0
    %156 = vmatpush1.msra.mxu0 0.0
    %157 = vmatprep.subr.mxu0 0.0
    %158 = vmatpush1.msra.mxu0 0.0
    %159 = vmatprep.subr.mxu0 0.0
    %160 = vmatpush1.msra.mxu0 0.0
    %161 = vmatprep.subr.mxu0 0.0
    %162 = vmatpush1.msra.mxu0 0.0
    %163 = vmatprep.subr.mxu0 0.0
    %164 = vmatpush1.msra.mxu0 0.0
    %165 = vmatprep.subr.mxu0 0.0
    %166 = vmatpush1.msra.mxu0 0.0
    %167 = vmatprep.subr.mxu0 0.0
    %168 = vmatpush1.msra.mxu0 0.0
    %169 = vmatprep.subr.mxu0 0.0
    %170 = vmatpush1.msra.mxu0 0.0
    %171 = vmatprep.subr.mxu0 0.0
    %172 = vmatpush1.msra.mxu0 0.0
    %173 = vmatprep.subr.mxu0 0.0
    %174 = vmatpush1.msra.mxu0 0.0
    %175 = vmatprep.subr.mxu0 0.0
    %176 = vmatpush1.msra.mxu0 0.0
    %177 = vmatprep.subr.mxu0 0.0
    %178 = vmatpush1.msra.mxu0 0.0
    %179 = vmatprep.subr.mxu0 0.0
    %180 = vmatpush1.msra.mxu0 0.0
    %181 = vmatprep.subr.mxu0 0.0
    %182 = vmatpush1.msra.mxu0 0.0
    %183 = vmatprep.mubr.f32.mxu0 0.0
    %184 = vmatmul.mubr.f32.gmra.mrb[0].mxu0 %v31
    %v185 = vpop.f32.mrb[0].mxu0
    %v186 = vadd.f32 %v116, %v185
    %v187 = vpop.f32.mrb[0].mxu0
    %188 = vdwg.mxu0
    %s189 = sld [smem:[#allocation2]]
    %v190 = vstv %s189
    %v191 = vmul.f32 %v190, %v186
    %s192 = sld [smem:[#allocation2 + $0x1]]
    %v193 = vstv %s192
    %v194 = vadd.f32 %v191, %v193
    %v195 = vsub.f32 0.0, %v194
    %v196 = vmul.f32 %v195, 1.442695
    %v197 = vpow.pop %v196
    %v198 = vadd.f32 %v197, 1.0
    %v199 = vrcp.pop %v198
    %s200 = sld [smem:[#allocation2 + $0x2]]
    %v201 = vstv %s200
    %v202 = vmul.f32 %v201, %v199
    %s203 = sld [smem:[#allocation2 + $0x3]]
    %v204 = vstv %s203
    %v205 = vmul.f32 %v204, %v186
    %v206 = vadd.f32 %v202, %v205
    %s207 = sld [smem:[#allocation2 + $0x4]]
    %v208 = vstv %s207
    %v209 = vadd.f32 %v206, %v208
    %vm210 = vcmask 256000
    %211 = vst.msk [vmem:[#allocation5] sm:$0x7] %vm210, %v209
    // Predicated region
    $region18: #{tpu_custom_call.1} parent=1 // pred_check
      _
    $region19: #{tpu_custom_call.1} parent=1 // pred_check_branch
      %213 = sbr.rel (0) target = $region21
    $region20: #{tpu_custom_call.1} parent=1 // pred_region
      %s215 = ssub.s32 64, 64
      %216 = vsyncadd [#allocation3], %s215
      %s218 = sshll.u32 [#allocation5], 4
      %s219 = int_to_ptr.vmem [resolvable:$true] %s218
      %221 = dma.vmem_to_hbm [thread:$0]  %s219, 64, %s3, [#allocation3]
    $region21: #{tpu_custom_call.1} parent=1 // pred_fallthru
      _
    // Predicated region
    $region22: #{tpu_custom_call.1} parent=1 // pred_check
      _
    $region23: #{tpu_custom_call.1} parent=1 // pred_check_branch
      %223 = sbr.rel (0) target = $region25
    $region24: #{tpu_custom_call.1} parent=1 // pred_region
      %224 = dma.done [#allocation3], 64
    $region25: #{tpu_custom_call.1} parent=1 // pred_fallthru
      _
    %225 = vsyncpa [#allocation3], 1
    %226 = vsyncpa [#allocation4], 1

</llo_original>
